<compile_context>
chip_gen: v7x
topology: tpu7x:2x2x1
jax: 0.10.0
libtpu: 0.0.40
codegen_flags: <defaults>
</compile_context>

<pallas_src>
import functools

import jax
import jax.numpy as jnp
from jax.experimental import pallas as pl
from jax.experimental.pallas import tpu as pltpu


def sensitivity_kernel(x_ref, w1t_ref, b1_ref, w2t_ref, b2_ref,
                       wbt_ref, bb_ref, wo_ref, bo_ref, out_ref, *,
                       output_size):
    """Full forward pass on one VMEM-resident, batch-on-lanes tile.

    Shapes (bt = batch tile on the lane axis):
      x_ref   : (F_tot, bt)            fused [mdt feats | ost feats] input
      w1t_ref : (n_tot*EMB, F_tot)     block-diag tower layer 1 (transposed)
      w2t_ref : (n_tot*SO, n_tot*EMB)  block-diag tower layer 2 (transposed)
      wbt_ref : (GH, n_tot*SO)         bridge (transposed)
      wo_ref  : (GH, 1) if output_size == 1 else (output_size, GH)
      b*_ref  : column biases, broadcast over lanes
      out_ref : (output_size, bt)      lane-dense output tile
    """
    f32 = jnp.float32

    # Fused tower layer 1 + ReLU  -> (n_tot*EMB, bt)
    h = jnp.maximum(
        jnp.dot(w1t_ref[...], x_ref[...], preferred_element_type=f32)
        + b1_ref[...], 0.0)
    # Fused tower layer 2 + ReLU  -> (n_tot*SO, bt)  (== concat over devices)
    h = jnp.maximum(
        jnp.dot(w2t_ref[...], h, preferred_element_type=f32)
        + b2_ref[...], 0.0)
    # fc_bridge + ReLU            -> (GH, bt)
    g = jnp.maximum(
        jnp.dot(wbt_ref[...], h, preferred_element_type=f32)
        + bb_ref[...], 0.0)

    if output_size == 1:
        # fc_out as VPU multiply + sublane reduction (no MXU pass for 1 column).
        logit = jnp.sum(g * wo_ref[...], axis=0, keepdims=True) + bo_ref[...]
        out_ref[...] = jax.nn.sigmoid(logit)
    else:
        logit = (jnp.dot(wo_ref[...], g, preferred_element_type=f32)
                 + bo_ref[...])
        # Numerically stable softmax over the class (sublane) axis.
        m = jnp.max(logit, axis=0, keepdims=True)
        e = jnp.exp(logit - m)
        out_ref[...] = e / jnp.sum(e, axis=0, keepdims=True)


def _block_diag(blocks):
    """Block-diagonal matrix from a list of 2-D blocks (one-time, wrapper-side)."""
    rows = sum(b.shape[0] for b in blocks)
    cols = sum(b.shape[1] for b in blocks)
    out = jnp.zeros((rows, cols), dtype=blocks[0].dtype)
    r = c = 0
    for b in blocks:
        out = out.at[r:r + b.shape[0], c:c + b.shape[1]].set(b)
        r, c = r + b.shape[0], c + b.shape[1]
    return out


def prepare_params(params, *, n_mdt, n_ost):
    """One-time weight preprocessing, hoisted out of the per-call hot path.

    Builds the fused block-diagonal tower weights, tiled biases, and the
    transposed (batch-on-lanes) forms the kernel consumes.  Weights are
    (in, out); biases are 1-D, matching the reference parameterization.
    """
    f32 = jnp.float32
    w1 = _block_diag([params["w_mdt1"]] * n_mdt + [params["w_ost1"]] * n_ost)
    b1 = jnp.concatenate([jnp.tile(params["b_mdt1"], n_mdt),
                          jnp.tile(params["b_ost1"], n_ost)])
    w2 = _block_diag([params["w_mdt2"]] * n_mdt + [params["w_ost2"]] * n_ost)
    b2 = jnp.concatenate([jnp.tile(params["b_mdt2"], n_mdt),
                          jnp.tile(params["b_ost2"], n_ost)])

    output_size = params["w_out"].shape[1]
    if output_size == 1:
        wo = params["w_out"]          # (GH, 1): broadcast column, VPU path
    else:
        wo = params["w_out"].T        # (output_size, GH): matmul LHS

    return {
        "w1t": w1.T.astype(f32),
        "b1":  b1.astype(f32).reshape(-1, 1),
        "w2t": w2.T.astype(f32),
        "b2":  b2.astype(f32).reshape(-1, 1),
        "wbt": params["w_bridge"].T.astype(f32),
        "bb":  params["b_bridge"].astype(f32).reshape(-1, 1),
        "wo":  wo.astype(f32),
        "bo":  params["b_out"].astype(f32).reshape(-1, 1),
    }


@jax.jit
def sensitivity_forward(mdt, ost, prepared):
    f32 = jnp.float32
    B = mdt.shape[0]
    output_size = prepared["bo"].shape[0]

    # (B, n_dev, feat) -> (B, n_dev*feat); concat towers; transpose so the
    # batch sits on the lane axis (layout plumbing, done once by XLA).
    x = jnp.concatenate([mdt.reshape(B, -1), ost.reshape(B, -1)],
                        axis=1).astype(f32)
    xT = x.T                                        # (F_tot, B)
    F_tot = xT.shape[0]

    # Batch tile: big lane-dense tiles amortize the ~0.35 us/step grid
    # overhead; for very large B keep >=2 parallel steps so v7x megacore can
    # split the batch (no effect on single-core v5e/v6e).
    if B <= 1024:
        bt = B
    else:
        bt = min(4096, ((B + 1) // 2 + 127) // 128 * 128)
    grid = (pl.cdiv(B, bt),)

    def replicated(a):
        return pl.BlockSpec(a.shape, lambda i: (0, 0))

    weights = (prepared["w1t"], prepared["b1"], prepared["w2t"], prepared["b2"],
               prepared["wbt"], prepared["bb"], prepared["wo"], prepared["bo"])

    kernel = functools.partial(sensitivity_kernel, output_size=output_size)

    outT = pl.pallas_call(
        kernel,
        out_shape=jax.ShapeDtypeStruct((output_size, B), f32),
        grid=grid,
        in_specs=[pl.BlockSpec((F_tot, bt), lambda i: (0, i))]
                 + [replicated(w) for w in weights],
        out_specs=pl.BlockSpec((output_size, bt), lambda i: (0, i)),
        compiler_params=pltpu.CompilerParams(
            dimension_semantics=("parallel",)),
    )(xT, *weights)

    return outT.T                                   # (B, output_size)


def reference_forward(mdt, ost, params, *, n_mdt, n_ost, server_out_size):
    """Pure-JAX re-implementation of the PyTorch forward (for verification)."""
    B = mdt.shape[0]

    m = mdt.reshape(-1, mdt.shape[-1])
    m = jnp.maximum(m @ params["w_mdt1"] + params["b_mdt1"], 0.0)
    m = jnp.maximum(m @ params["w_mdt2"] + params["b_mdt2"], 0.0)
    m = m.reshape(B, n_mdt * server_out_size)

    o = ost.reshape(-1, ost.shape[-1])
    o = jnp.maximum(o @ params["w_ost1"] + params["b_ost1"], 0.0)
    o = jnp.maximum(o @ params["w_ost2"] + params["b_ost2"], 0.0)
    o = o.reshape(B, n_ost * server_out_size)

    x = jnp.concatenate([m, o], axis=1)
    x = jnp.maximum(x @ params["w_bridge"] + params["b_bridge"], 0.0)
    x = x @ params["w_out"] + params["b_out"]
    if params["w_out"].shape[1] == 1:
        return jax.nn.sigmoid(x)
    return jax.nn.softmax(x, axis=1)


if __name__ == "__main__":
    # Synthetic module config (determines all shapes, as in __init__).
    devices = {"mdt": ["mdt0", "mdt1"],
               "ost": ["ost0", "ost1", "ost2", "ost3"]}
    features = {"stats": ["s0", "s1", "s2"],
                "mdt_trace": ["mt0", "mt1", "mt2", "mt3", "mt4"],
                "ost_trace": ["ot0", "ot1", "ot2", "ot3", "ot4"]}

    n_mdt, n_ost = len(devices["mdt"]), len(devices["ost"])
    mdt_in = len(features["stats"]) + len(features["mdt_trace"])    # 8
    ost_in = len(features["stats"]) + len(features["ost_trace"])    # 8
    server_emb_size = 16
    server_out_size = 8
    global_hidden_size = 16
    batch = 2

    key = jax.random.PRNGKey(0)
    keys = jax.random.split(key, 20)

    def init(k, shape, scale=0.1):
        return (scale * jax.random.normal(k, shape)).astype(jnp.float32)

    base = {
        "w_mdt1":   init(keys[0], (mdt_in, server_emb_size)),
        "b_mdt1":   init(keys[1], (server_emb_size,)),
        "w_mdt2":   init(keys[2], (server_emb_size, server_out_size)),
        "b_mdt2":   init(keys[3], (server_out_size,)),
        "w_ost1":   init(keys[4], (ost_in, server_emb_size)),
        "b_ost1":   init(keys[5], (server_emb_size,)),
        "w_ost2":   init(keys[6], (server_emb_size, server_out_size)),
        "b_ost2":   init(keys[7], (server_out_size,)),
        "w_bridge": init(keys[8], ((n_mdt + n_ost) * server_out_size,
                                   global_hidden_size)),
        "b_bridge": init(keys[9], (global_hidden_size,)),
    }

    mdt = jax.random.normal(keys[12], (batch, n_mdt, mdt_in), jnp.float32)
    ost = jax.random.normal(keys[13], (batch, n_ost, ost_in), jnp.float32)

    # Validate both last-activation paths: sigmoid (output_size=1) and
    # softmax (output_size=3), per the correctness-review note.
    for output_size, kw, kb in ((1, 14, 15), (3, 16, 17)):
        params = dict(base,
                      w_out=init(keys[kw], (global_hidden_size, output_size)),
                      b_out=init(keys[kb], (output_size,)))
        prepared = prepare_params(params, n_mdt=n_mdt, n_ost=n_ost)

        out = sensitivity_forward(mdt, ost, prepared)
        out = jax.block_until_ready(out)

        ref = reference_forward(mdt, ost, params, n_mdt=n_mdt, n_ost=n_ost,
                                server_out_size=server_out_size)

        assert out.shape == (batch, output_size), (out.shape, output_size)
        assert jnp.allclose(out, ref, atol=1e-5, rtol=1e-5), \
            (output_size, out, ref)

    print("KERNEL_OK")
</pallas_src>

<mosaic_0001>
module attributes {stable_mosaic.version = 11 : i64} {
  func.func @sensitivity_kernel(%arg0: i32, %arg1: memref<48x2xf32, #tpu.memory_space<vmem>>, %arg2: memref<96x48xf32, #tpu.memory_space<vmem>>, %arg3: memref<96x1xf32, #tpu.memory_space<vmem>>, %arg4: memref<48x96xf32, #tpu.memory_space<vmem>>, %arg5: memref<48x1xf32, #tpu.memory_space<vmem>>, %arg6: memref<16x48xf32, #tpu.memory_space<vmem>>, %arg7: memref<16x1xf32, #tpu.memory_space<vmem>>, %arg8: memref<16x1xf32, #tpu.memory_space<vmem>>, %arg9: memref<1x1xf32, #tpu.memory_space<vmem>>, %arg10: memref<1x2xf32, #tpu.memory_space<vmem>>) attributes {dimension_semantics = [#tpu.dimension_semantics<parallel>], iteration_bounds = array<i64: 1>, scalar_prefetch = 0 : i64, scratch_operands = 0 : i64, tpu.core_type = #tpu.core_type<tc>, window_params = [{transform_indices = @transform_0, window_bounds = array<i64: 48, 2>}, {pipeline_mode = #tpu.pipeline_mode<synchronous>, transform_indices = @transform_1, window_bounds = array<i64: 96, 48>}, {pipeline_mode = #tpu.pipeline_mode<synchronous>, transform_indices = @transform_2, window_bounds = array<i64: 96, 1>}, {pipeline_mode = #tpu.pipeline_mode<synchronous>, transform_indices = @transform_3, window_bounds = array<i64: 48, 96>}, {pipeline_mode = #tpu.pipeline_mode<synchronous>, transform_indices = @transform_4, window_bounds = array<i64: 48, 1>}, {pipeline_mode = #tpu.pipeline_mode<synchronous>, transform_indices = @transform_5, window_bounds = array<i64: 16, 48>}, {pipeline_mode = #tpu.pipeline_mode<synchronous>, transform_indices = @transform_6, window_bounds = array<i64: 16, 1>}, {pipeline_mode = #tpu.pipeline_mode<synchronous>, transform_indices = @transform_7, window_bounds = array<i64: 16, 1>}, {pipeline_mode = #tpu.pipeline_mode<synchronous>, transform_indices = @transform_8, window_bounds = array<i64: 1, 1>}, {transform_indices = @transform_9, window_bounds = array<i64: 1, 2>}]} {
    %c0 = arith.constant 0 : index
    %c0_0 = arith.constant 0 : index
    %0 = vector.load %arg2[%c0, %c0_0] : memref<96x48xf32, #tpu.memory_space<vmem>>, vector<96x48xf32>
    %c0_1 = arith.constant 0 : index
    %c0_2 = arith.constant 0 : index
    %1 = vector.load %arg1[%c0_1, %c0_2] : memref<48x2xf32, #tpu.memory_space<vmem>>, vector<48x2xf32>
    %cst = arith.constant dense<0.000000e+00> : vector<96x2xf32>
    %2 = tpu.matmul %0, %1, %cst {dimension_numbers = #tpu.dot_dimension_numbers<[1], [0], [0], [1], [0, 0, 1, 1], [], []>} : vector<96x48xf32>, vector<48x2xf32>, vector<96x2xf32> -> vector<96x2xf32>
    %c0_3 = arith.constant 0 : index
    %c0_4 = arith.constant 0 : index
    %3 = vector.load %arg3[%c0_3, %c0_4] : memref<96x1xf32, #tpu.memory_space<vmem>>, vector<96x1xf32>
    %4 = vector.broadcast %3 : vector<96x1xf32> to vector<96x2xf32>
    %5 = arith.addf %2, %4 : vector<96x2xf32>
    %cst_5 = arith.constant 0.000000e+00 : f32
    %6 = vector.broadcast %cst_5 : f32 to vector<96x2xf32>
    %7 = arith.maximumf %5, %6 : vector<96x2xf32>
    %c0_6 = arith.constant 0 : index
    %c0_7 = arith.constant 0 : index
    %8 = vector.load %arg4[%c0_6, %c0_7] : memref<48x96xf32, #tpu.memory_space<vmem>>, vector<48x96xf32>
    %cst_8 = arith.constant dense<0.000000e+00> : vector<48x2xf32>
    %9 = tpu.matmul %8, %7, %cst_8 {dimension_numbers = #tpu.dot_dimension_numbers<[1], [0], [0], [1], [0, 0, 1, 1], [], []>} : vector<48x96xf32>, vector<96x2xf32>, vector<48x2xf32> -> vector<48x2xf32>
    %c0_9 = arith.constant 0 : index
    %c0_10 = arith.constant 0 : index
    %10 = vector.load %arg5[%c0_9, %c0_10] : memref<48x1xf32, #tpu.memory_space<vmem>>, vector<48x1xf32>
    %11 = vector.broadcast %10 : vector<48x1xf32> to vector<48x2xf32>
    %12 = arith.addf %9, %11 : vector<48x2xf32>
    %cst_11 = arith.constant 0.000000e+00 : f32
    %13 = vector.broadcast %cst_11 : f32 to vector<48x2xf32>
    %14 = arith.maximumf %12, %13 : vector<48x2xf32>
    %c0_12 = arith.constant 0 : index
    %c0_13 = arith.constant 0 : index
    %15 = vector.load %arg6[%c0_12, %c0_13] : memref<16x48xf32, #tpu.memory_space<vmem>>, vector<16x48xf32>
    %cst_14 = arith.constant dense<0.000000e+00> : vector<16x2xf32>
    %16 = tpu.matmul %15, %14, %cst_14 {dimension_numbers = #tpu.dot_dimension_numbers<[1], [0], [0], [1], [0, 0, 1, 1], [], []>} : vector<16x48xf32>, vector<48x2xf32>, vector<16x2xf32> -> vector<16x2xf32>
    %c0_15 = arith.constant 0 : index
    %c0_16 = arith.constant 0 : index
    %17 = vector.load %arg7[%c0_15, %c0_16] : memref<16x1xf32, #tpu.memory_space<vmem>>, vector<16x1xf32>
    %18 = vector.broadcast %17 : vector<16x1xf32> to vector<16x2xf32>
    %19 = arith.addf %16, %18 : vector<16x2xf32>
    %cst_17 = arith.constant 0.000000e+00 : f32
    %20 = vector.broadcast %cst_17 : f32 to vector<16x2xf32>
    %21 = arith.maximumf %19, %20 : vector<16x2xf32>
    %c0_18 = arith.constant 0 : index
    %c0_19 = arith.constant 0 : index
    %22 = vector.load %arg8[%c0_18, %c0_19] : memref<16x1xf32, #tpu.memory_space<vmem>>, vector<16x1xf32>
    %23 = vector.broadcast %22 : vector<16x1xf32> to vector<16x2xf32>
    %24 = arith.mulf %21, %23 : vector<16x2xf32>
    %cst_20 = arith.constant dense<0.000000e+00> : vector<2xf32>
    %25 = vector.multi_reduction <add>, %24, %cst_20 [0] : vector<16x2xf32> to vector<2xf32>
    %26 = vector.shape_cast %25 : vector<2xf32> to vector<1x2xf32>
    %c0_21 = arith.constant 0 : index
    %c0_22 = arith.constant 0 : index
    %27 = vector.load %arg9[%c0_21, %c0_22] : memref<1x1xf32, #tpu.memory_space<vmem>>, vector<1x1xf32>
    %28 = vector.broadcast %27 : vector<1x1xf32> to vector<1x2xf32>
    %29 = arith.addf %26, %28 : vector<1x2xf32>
    %30 = arith.negf %29 : vector<1x2xf32>
    %31 = math.exp %30 : vector<1x2xf32>
    %cst_23 = arith.constant 1.000000e+00 : f32
    %32 = vector.broadcast %cst_23 : f32 to vector<1x2xf32>
    %33 = arith.addf %32, %31 : vector<1x2xf32>
    %34 = arith.divf %32, %33 : vector<1x2xf32>
    %c0_24 = arith.constant 0 : index
    %c0_25 = arith.constant 0 : index
    %35 = vector.load %arg10[%c0_24, %c0_25] : memref<1x2xf32, #tpu.memory_space<vmem>>, vector<1x2xf32>
    tpu.vector_store %arg10[%c0_24, %c0_25], %34 {strides = array<i32>} : memref<1x2xf32, #tpu.memory_space<vmem>>, vector<1x2xf32>,
    return
  }
  func.func @transform_0(%arg0: i32) -> (i32, i32) {
    %c0_i32 = arith.constant 0 : i32
    %c0_i32_0 = arith.constant 0 : i32
    return %c0_i32, %arg0 : i32, i32
  }
  func.func @transform_1(%arg0: i32) -> (i32, i32) {
    %c0_i32 = arith.constant 0 : i32
    %c0_i32_0 = arith.constant 0 : i32
    %c0_i32_1 = arith.constant 0 : i32
    return %c0_i32, %c0_i32_0 : i32, i32
  }
  func.func @transform_2(%arg0: i32) -> (i32, i32) {
    %c0_i32 = arith.constant 0 : i32
    %c0_i32_0 = arith.constant 0 : i32
    %c0_i32_1 = arith.constant 0 : i32
    return %c0_i32, %c0_i32_0 : i32, i32
  }
  func.func @transform_3(%arg0: i32) -> (i32, i32) {
    %c0_i32 = arith.constant 0 : i32
    %c0_i32_0 = arith.constant 0 : i32
    %c0_i32_1 = arith.constant 0 : i32
    return %c0_i32, %c0_i32_0 : i32, i32
  }
  func.func @transform_4(%arg0: i32) -> (i32, i32) {
    %c0_i32 = arith.constant 0 : i32
    %c0_i32_0 = arith.constant 0 : i32
    %c0_i32_1 = arith.constant 0 : i32
    return %c0_i32, %c0_i32_0 : i32, i32
  }
  func.func @transform_5(%arg0: i32) -> (i32, i32) {
    %c0_i32 = arith.constant 0 : i32
    %c0_i32_0 = arith.constant 0 : i32
    %c0_i32_1 = arith.constant 0 : i32
    return %c0_i32, %c0_i32_0 : i32, i32
  }
  func.func @transform_6(%arg0: i32) -> (i32, i32) {
    %c0_i32 = arith.constant 0 : i32
    %c0_i32_0 = arith.constant 0 : i32
    %c0_i32_1 = arith.constant 0 : i32
    return %c0_i32, %c0_i32_0 : i32, i32
  }
  func.func @transform_7(%arg0: i32) -> (i32, i32) {
    %c0_i32 = arith.constant 0 : i32
    %c0_i32_0 = arith.constant 0 : i32
    %c0_i32_1 = arith.constant 0 : i32
    return %c0_i32, %c0_i32_0 : i32, i32
  }
  func.func @transform_8(%arg0: i32) -> (i32, i32) {
    %c0_i32 = arith.constant 0 : i32
    %c0_i32_0 = arith.constant 0 : i32
    %c0_i32_1 = arith.constant 0 : i32
    return %c0_i32, %c0_i32_0 : i32, i32
  }
  func.func @transform_9(%arg0: i32) -> (i32, i32) {
    %c0_i32 = arith.constant 0 : i32
    %c0_i32_0 = arith.constant 0 : i32
    return %c0_i32, %arg0 : i32, i32
  }
}

</mosaic_0001>

<llo_original>
// kernel: sensitivity_forward.1
$region0: #{sensitivity_forward.1}
  #allocation0 [shape = 'u32[]', space=smem, size = 0x4, offset = 0x4, fixed_abs, tag = 'smem constant byte address 0x4 - core index']
  #allocation1 [shape = 'u32[144,128]{1,0:T(1,128)}', space=vmem, size = 0x12000, scoped, tag = 'internal scratch']
  #allocation2 [shape = 'f32[1,1]{1,0:T(1,128)S(1)}', space=vmem, size = 0x200, scoped, tag = 'scoped memory for sensitivity_forward.1']
  %s0 = inlined_call_operand.vmem [shape: f32[48,2], index: 0, kind: input, shape index: {}]
  %s1 = inlined_call_operand.vmem [shape: f32[96,48], index: 1, kind: input, shape index: {}]
  %s2 = inlined_call_operand.vmem [shape: f32[96,1], index: 2, kind: input, shape index: {}]
  %s3 = inlined_call_operand.vmem [shape: f32[48,96], index: 3, kind: input, shape index: {}]
  %s4 = inlined_call_operand.vmem [shape: f32[48,1], index: 4, kind: input, shape index: {}]
  %s5 = inlined_call_operand.vmem [shape: f32[16,48], index: 5, kind: input, shape index: {}]
  %s6 = inlined_call_operand.vmem [shape: f32[16,1], index: 6, kind: input, shape index: {}]
  %s7 = inlined_call_operand.vmem [shape: f32[16,1], index: 7, kind: input, shape index: {}]
  %s8 = inlined_call_operand.<no memory space> [shape: f32[1,1], index: 8, kind: input, shape index: {}]
  %s9 = inlined_call_operand.hbm [shape: f32[1,2], index: 9, kind: output, shape index: {}]
  %s10 = sld [smem:[#allocation0]]
  $region46: #{sensitivity_forward.1} parent=0
    _
  %s12 = ssub.s32 1, %s10
  %s13 = scalar_select 0, %s12, %s10
  %v14 = vstv %s8
  %15 = vst [vmem:[#allocation2] sm:$0x1] %v14
  $region1: #{sensitivity_forward.1} parent=0
    #allocation3 [shape = 'u8[512]{0}', space=vmem, size = 0x400, scoped, tag = 'output window, operand 0, single buffered']
    #allocation4 [shape = 's32[1]{0}', space=sflag, size = 0x4, scoped, tag = 'scoped memory for sensitivity_forward.1']
    %16 = vsyncpa [#allocation4], 0
    // Predicated region
    $region2: #{sensitivity_forward.1} parent=1 // pred_check
      _
    $region3: #{sensitivity_forward.1} parent=1 // pred_check_branch
      %18 = sbr.rel (0) target = $region5
    $region4: #{sensitivity_forward.1} parent=1 // pred_region
      _
    $region5: #{sensitivity_forward.1} parent=1 // pred_fallthru
      _
    // Predicated region
    $region6: #{sensitivity_forward.1} parent=1 // pred_check
      _
    $region7: #{sensitivity_forward.1} parent=1 // pred_check_branch
      %20 = sbr.rel (0) target = $region9
    $region8: #{sensitivity_forward.1} parent=1 // pred_region
      _
    $region9: #{sensitivity_forward.1} parent=1 // pred_fallthru
      _
    // Predicated region
    $region10: #{sensitivity_forward.1} parent=1 // pred_check
      _
    $region11: #{sensitivity_forward.1} parent=1 // pred_check_branch
      %22 = sbr.rel (0) target = $region13
    $region12: #{sensitivity_forward.1} parent=1 // pred_region
      _
    $region13: #{sensitivity_forward.1} parent=1 // pred_fallthru
      _
    // Predicated region
    $region14: #{sensitivity_forward.1} parent=1 // pred_check
      _
    $region15: #{sensitivity_forward.1} parent=1 // pred_check_branch
      %24 = sbr.rel (0) target = $region17
    $region16: #{sensitivity_forward.1} parent=1 // pred_region
      _
    $region17: #{sensitivity_forward.1} parent=1 // pred_fallthru
      _
    // Predicated region
    $region18: #{sensitivity_forward.1} parent=1 // pred_check
      _
    $region19: #{sensitivity_forward.1} parent=1 // pred_check_branch
      %26 = sbr.rel (0) target = $region21
    $region20: #{sensitivity_forward.1} parent=1 // pred_region
      _
    $region21: #{sensitivity_forward.1} parent=1 // pred_fallthru
      _
    // Predicated region
    $region22: #{sensitivity_forward.1} parent=1 // pred_check
      _
    $region23: #{sensitivity_forward.1} parent=1 // pred_check_branch
      %28 = sbr.rel (0) target = $region25
    $region24: #{sensitivity_forward.1} parent=1 // pred_region
      _
    $region25: #{sensitivity_forward.1} parent=1 // pred_fallthru
      _
    // Predicated region
    $region26: #{sensitivity_forward.1} parent=1 // pred_check
      _
    $region27: #{sensitivity_forward.1} parent=1 // pred_check_branch
      %30 = sbr.rel (0) target = $region29
    $region28: #{sensitivity_forward.1} parent=1 // pred_region
      _
    $region29: #{sensitivity_forward.1} parent=1 // pred_fallthru
      _
    // Predicated region
    $region30: #{sensitivity_forward.1} parent=1 // pred_check
      _
    $region31: #{sensitivity_forward.1} parent=1 // pred_check_branch
      %32 = sbr.rel (0) target = $region33
    $region32: #{sensitivity_forward.1} parent=1 // pred_region
      _
    $region33: #{sensitivity_forward.1} parent=1 // pred_fallthru
      _
    // Predicated region
    $region34: #{sensitivity_forward.1} parent=1 // pred_check
      _
    $region35: #{sensitivity_forward.1} parent=1 // pred_check_branch
      %34 = sbr.rel (0) target = $region37
    $region36: #{sensitivity_forward.1} parent=1 // pred_region
      _
    $region37: #{sensitivity_forward.1} parent=1 // pred_fallthru
      _
    %v35 = vld [vmem:[%s1] sm:$0xff]
    %v36 = vld [vmem:[%s1 + $0x8] sm:$0xff]
    %v37 = vld [vmem:[%s1 + $0x10] sm:$0xff]
    %v38 = vld [vmem:[%s1 + $0x18] sm:$0xff]
    %v39 = vld [vmem:[%s1 + $0x20] sm:$0xff]
    %v40 = vld [vmem:[%s1 + $0x28] sm:$0xff]
    %v41 = vld [vmem:[%s1 + $0x30] sm:$0xff]
    %v42 = vld [vmem:[%s1 + $0x38] sm:$0xff]
    %v43 = vld [vmem:[%s1 + $0x40] sm:$0xff]
    %v44 = vld [vmem:[%s1 + $0x48] sm:$0xff]
    %v45 = vld [vmem:[%s1 + $0x50] sm:$0xff]
    %v46 = vld [vmem:[%s1 + $0x58] sm:$0xff]
    %v47 = vld [vmem:[%s0] sm:$0xff]
    %v48 = vld [vmem:[%s0 + $0x8] sm:$0xff]
    %v49 = vld [vmem:[%s0 + $0x10] sm:$0xff]
    %v50 = vld [vmem:[%s0 + $0x18] sm:$0xff]
    %v51 = vld [vmem:[%s0 + $0x20] sm:$0xff]
    %v52 = vld [vmem:[%s0 + $0x28] sm:$0xff]
    %v53 = vld [vmem:[%s2] sm:$0xff]
    %v54 = vld [vmem:[%s2 + $0x8] sm:$0xff]
    %v55 = vld [vmem:[%s2 + $0x10] sm:$0xff]
    %v56 = vld [vmem:[%s2 + $0x18] sm:$0xff]
    %v57 = vld [vmem:[%s2 + $0x20] sm:$0xff]
    %v58 = vld [vmem:[%s2 + $0x28] sm:$0xff]
    %v59 = vld [vmem:[%s2 + $0x30] sm:$0xff]
    %v60 = vld [vmem:[%s2 + $0x38] sm:$0xff]
    %v61 = vld [vmem:[%s2 + $0x40] sm:$0xff]
    %v62 = vld [vmem:[%s2 + $0x48] sm:$0xff]
    %v63 = vld [vmem:[%s2 + $0x50] sm:$0xff]
    %v64 = vld [vmem:[%s2 + $0x58] sm:$0xff]
    %66 = vset.pattern.permute.xlu0 0
    %67 = vperm.xlu0 %66, %v53
    %v68 = vpop.permute.xlu0 %67
    %71 = vset.pattern.permute.xlu0 0
    %72 = vperm.xlu0 %71, %v54
    %v73 = vpop.permute.xlu0 %72
    %76 = vset.pattern.permute.xlu0 0
    %77 = vperm.xlu0 %76, %v55
    %v78 = vpop.permute.xlu0 %77
    %81 = vset.pattern.permute.xlu0 0
    %82 = vperm.xlu0 %81, %v56
    %v83 = vpop.permute.xlu0 %82
    %86 = vset.pattern.permute.xlu0 0
    %87 = vperm.xlu0 %86, %v57
    %v88 = vpop.permute.xlu0 %87
    %91 = vset.pattern.permute.xlu0 0
    %92 = vperm.xlu0 %91, %v58
    %v93 = vpop.permute.xlu0 %92
    %96 = vset.pattern.permute.xlu0 0
    %97 = vperm.xlu0 %96, %v59
    %v98 = vpop.permute.xlu0 %97
    %101 = vset.pattern.permute.xlu0 0
    %102 = vperm.xlu0 %101, %v60
    %v103 = vpop.permute.xlu0 %102
    %106 = vset.pattern.permute.xlu0 0
    %107 = vperm.xlu0 %106, %v61
    %v108 = vpop.permute.xlu0 %107
    %111 = vset.pattern.permute.xlu0 0
    %112 = vperm.xlu0 %111, %v62
    %v113 = vpop.permute.xlu0 %112
    %116 = vset.pattern.permute.xlu0 0
    %117 = vperm.xlu0 %116, %v63
    %v118 = vpop.permute.xlu0 %117
    %121 = vset.pattern.permute.xlu0 0
    %122 = vperm.xlu0 %121, %v64
    %v123 = vpop.permute.xlu0 %122
    %vm125 = vcmask 392192
    %v127 = vsel %vm125, %v35, 0
    %v130 = vsel %vm125, %v36, 0
    %v133 = vsel %vm125, %v37, 0
    %v136 = vsel %vm125, %v38, 0
    %v139 = vsel %vm125, %v39, 0
    %v142 = vsel %vm125, %v40, 0
    %v145 = vsel %vm125, %v41, 0
    %v148 = vsel %vm125, %v42, 0
    %v151 = vsel %vm125, %v43, 0
    %v154 = vsel %vm125, %v44, 0
    %v157 = vsel %vm125, %v45, 0
    %v160 = vsel %vm125, %v46, 0
    %162 = vmatprep.subr.mxu0 0.0
    %163 = vmatpush1.msra.mxu0 %v47
    %164 = vmatprep.subr.mxu0 0.0
    %165 = vmatpush1.msra.mxu0 %v48
    %166 = vmatprep.subr.mxu0 0.0
    %167 = vmatpush1.msra.mxu0 %v49
    %168 = vmatprep.subr.mxu0 0.0
    %169 = vmatpush1.msra.mxu0 %v50
    %170 = vmatprep.subr.mxu0 0.0
    %171 = vmatpush1.msra.mxu0 %v51
    %172 = vmatprep.subr.mxu0 0.0
    %173 = vmatpush1.msra.mxu0 %v52
    %174 = vmatprep.subr.mxu0 0.0
    %175 = vmatpush1.msra.mxu0 0.0
    %176 = vmatprep.subr.mxu0 0.0
    %177 = vmatpush1.msra.mxu0 0.0
    %178 = vmatprep.subr.mxu0 0.0
    %179 = vmatpush1.msra.mxu0 0.0
    %180 = vmatprep.subr.mxu0 0.0
    %181 = vmatpush1.msra.mxu0 0.0
    %182 = vmatprep.subr.mxu0 0.0
    %183 = vmatpush1.msra.mxu0 0.0
    %184 = vmatprep.subr.mxu0 0.0
    %185 = vmatpush1.msra.mxu0 0.0
    %186 = vmatprep.subr.mxu0 0.0
    %187 = vmatpush1.msra.mxu0 0.0
    %188 = vmatprep.subr.mxu0 0.0
    %189 = vmatpush1.msra.mxu0 0.0
    %190 = vmatprep.subr.mxu0 0.0
    %191 = vmatpush1.msra.mxu0 0.0
    %192 = vmatprep.subr.mxu0 0.0
    %193 = vmatpush1.msra.mxu0 0.0
    %194 = vmatprep.subr.mxu0 0.0
    %195 = vmatpush1.msra.mxu0 0.0
    %196 = vmatprep.subr.mxu0 0.0
    %197 = vmatpush1.msra.mxu0 0.0
    %198 = vmatprep.subr.mxu0 0.0
    %199 = vmatpush1.msra.mxu0 0.0
    %200 = vmatprep.subr.mxu0 0.0
    %201 = vmatpush1.msra.mxu0 0.0
    %202 = vmatprep.subr.mxu0 0.0
    %203 = vmatpush1.msra.mxu0 0.0
    %204 = vmatprep.subr.mxu0 0.0
    %205 = vmatpush1.msra.mxu0 0.0
    %206 = vmatprep.subr.mxu0 0.0
    %207 = vmatpush1.msra.mxu0 0.0
    %208 = vmatprep.subr.mxu0 0.0
    %209 = vmatpush1.msra.mxu0 0.0
    %210 = vmatprep.subr.mxu0 0.0
    %211 = vmatpush1.msra.mxu0 0.0
    %212 = vmatprep.subr.mxu0 0.0
    %213 = vmatpush1.msra.mxu0 0.0
    %214 = vmatprep.subr.mxu0 0.0
    %215 = vmatpush1.msra.mxu0 0.0
    %216 = vmatprep.subr.mxu0 0.0
    %217 = vmatpush1.msra.mxu0 0.0
    %218 = vmatprep.subr.mxu0 0.0
    %219 = vmatpush1.msra.mxu0 0.0
    %220 = vmatprep.subr.mxu0 0.0
    %221 = vmatpush1.msra.mxu0 0.0
    %222 = vmatprep.subr.mxu0 0.0
    %223 = vmatpush1.msra.mxu0 0.0
    %224 = vmatprep.subr.mxu0 0.0
    %225 = vmatpush1.msra.mxu0 0.0
    %226 = vmatprep.mubr.f32.mxu0 0.0
    %227 = vmatmul.mubr.f32.gmra.mrb[0].mxu0 %v127
    %v228 = vpop.f32.mrb[0].mxu0
    %v229 = vadd.f32 %v68, %v228
    %v230 = vpop.f32.mrb[0].mxu0
    %231 = vmatprep.mubr.f32.mxu0 0.0
    %232 = vmatmul.mubr.f32.gmra.mrb[0].mxu0 %v130
    %v233 = vpop.f32.mrb[0].mxu0
    %v234 = vadd.f32 %v73, %v233
    %v235 = vpop.f32.mrb[0].mxu0
    %236 = vmatprep.mubr.f32.mxu0 0.0
    %237 = vmatmul.mubr.f32.gmra.mrb[0].mxu0 %v133
    %v238 = vpop.f32.mrb[0].mxu0
    %v239 = vadd.f32 %v78, %v238
    %v240 = vpop.f32.mrb[0].mxu0
    %241 = vmatprep.mubr.f32.mxu0 0.0
    %242 = vmatmul.mubr.f32.gmra.mrb[0].mxu0 %v136
    %v243 = vpop.f32.mrb[0].mxu0
    %v244 = vadd.f32 %v83, %v243
    %v245 = vpop.f32.mrb[0].mxu0
    %246 = vmatprep.mubr.f32.mxu0 0.0
    %247 = vmatmul.mubr.f32.gmra.mrb[0].mxu0 %v139
    %v248 = vpop.f32.mrb[0].mxu0
    %v249 = vadd.f32 %v88, %v248
    %v250 = vpop.f32.mrb[0].mxu0
    %251 = vmatprep.mubr.f32.mxu0 0.0
    %252 = vmatmul.mubr.f32.gmra.mrb[0].mxu0 %v142
    %v253 = vpop.f32.mrb[0].mxu0
    %v254 = vadd.f32 %v93, %v253
    %v255 = vpop.f32.mrb[0].mxu0
    %256 = vmatprep.mubr.f32.mxu0 0.0
    %257 = vmatmul.mubr.f32.gmra.mrb[0].mxu0 %v145
    %v258 = vpop.f32.mrb[0].mxu0
    %v259 = vadd.f32 %v98, %v258
    %v260 = vpop.f32.mrb[0].mxu0
    %261 = vmatprep.mubr.f32.mxu0 0.0
    %262 = vmatmul.mubr.f32.gmra.mrb[0].mxu0 %v148
    %v263 = vpop.f32.mrb[0].mxu0
    %v264 = vadd.f32 %v103, %v263
    %v265 = vpop.f32.mrb[0].mxu0
    %266 = vmatprep.mubr.f32.mxu0 0.0
    %267 = vmatmul.mubr.f32.gmra.mrb[0].mxu0 %v151
    %v268 = vpop.f32.mrb[0].mxu0
    %v269 = vadd.f32 %v108, %v268
    %v270 = vpop.f32.mrb[0].mxu0
    %271 = vmatprep.mubr.f32.mxu0 0.0
    %272 = vmatmul.mubr.f32.gmra.mrb[0].mxu0 %v154
    %v273 = vpop.f32.mrb[0].mxu0
    %v274 = vadd.f32 %v113, %v273
    %v275 = vpop.f32.mrb[0].mxu0
    %276 = vmatprep.mubr.f32.mxu0 0.0
    %277 = vmatmul.mubr.f32.gmra.mrb[0].mxu0 %v157
    %v278 = vpop.f32.mrb[0].mxu0
    %v279 = vadd.f32 %v118, %v278
    %v280 = vpop.f32.mrb[0].mxu0
    %281 = vmatprep.mubr.f32.mxu0 0.0
    %282 = vmatmul.mubr.f32.gmra.mrb[0].mxu0 %v160
    %v283 = vpop.f32.mrb[0].mxu0
    %v284 = vadd.f32 %v123, %v283
    %v285 = vpop.f32.mrb[0].mxu0
    %286 = vdwg.mxu0
    %v287 = vmax.f32 %v229, 0.0
    %v288 = vmax.f32 %v234, 0.0
    %v289 = vmax.f32 %v239, 0.0
    %v290 = vmax.f32 %v244, 0.0
    %v291 = vmax.f32 %v249, 0.0
    %v292 = vmax.f32 %v254, 0.0
    %v293 = vmax.f32 %v259, 0.0
    %v294 = vmax.f32 %v264, 0.0
    %v295 = vmax.f32 %v269, 0.0
    %v296 = vmax.f32 %v274, 0.0
    %v297 = vmax.f32 %v279, 0.0
    %v298 = vmax.f32 %v284, 0.0
    %v299 = vld [vmem:[%s3] sm:$0xff]
    %v300 = vld [vmem:[%s3 + $0x8] sm:$0xff]
    %v301 = vld [vmem:[%s3 + $0x10] sm:$0xff]
    %v302 = vld [vmem:[%s3 + $0x18] sm:$0xff]
    %v303 = vld [vmem:[%s3 + $0x20] sm:$0xff]
    %v304 = vld [vmem:[%s3 + $0x28] sm:$0xff]
    %v305 = vld [vmem:[%s4] sm:$0xff]
    %v306 = vld [vmem:[%s4 + $0x8] sm:$0xff]
    %v307 = vld [vmem:[%s4 + $0x10] sm:$0xff]
    %v308 = vld [vmem:[%s4 + $0x18] sm:$0xff]
    %v309 = vld [vmem:[%s4 + $0x20] sm:$0xff]
    %v310 = vld [vmem:[%s4 + $0x28] sm:$0xff]
    %312 = vset.pattern.permute.xlu0 0
    %313 = vperm.xlu0 %312, %v305
    %v314 = vpop.permute.xlu0 %313
    %317 = vset.pattern.permute.xlu0 0
    %318 = vperm.xlu0 %317, %v306
    %v319 = vpop.permute.xlu0 %318
    %322 = vset.pattern.permute.xlu0 0
    %323 = vperm.xlu0 %322, %v307
    %v324 = vpop.permute.xlu0 %323
    %327 = vset.pattern.permute.xlu0 0
    %328 = vperm.xlu0 %327, %v308
    %v329 = vpop.permute.xlu0 %328
    %332 = vset.pattern.permute.xlu0 0
    %333 = vperm.xlu0 %332, %v309
    %v334 = vpop.permute.xlu0 %333
    %337 = vset.pattern.permute.xlu0 0
    %338 = vperm.xlu0 %337, %v310
    %v339 = vpop.permute.xlu0 %338
    %vm341 = vcmask 785408
    %v343 = vsel %vm341, %v299, 0
    %v346 = vsel %vm341, %v300, 0
    %v349 = vsel %vm341, %v301, 0
    %v352 = vsel %vm341, %v302, 0
    %v355 = vsel %vm341, %v303, 0
    %v358 = vsel %vm341, %v304, 0
    %360 = vmatprep.subr.mxu0 0.0
    %361 = vmatpush1.msra.mxu0 %v287
    %362 = vmatprep.subr.mxu0 0.0
    %363 = vmatpush1.msra.mxu0 %v288
    %364 = vmatprep.subr.mxu0 0.0
    %365 = vmatpush1.msra.mxu0 %v289
    %366 = vmatprep.subr.mxu0 0.0
    %367 = vmatpush1.msra.mxu0 %v290
    %368 = vmatprep.subr.mxu0 0.0
    %369 = vmatpush1.msra.mxu0 %v291
    %370 = vmatprep.subr.mxu0 0.0
    %371 = vmatpush1.msra.mxu0 %v292
    %372 = vmatprep.subr.mxu0 0.0
    %373 = vmatpush1.msra.mxu0 %v293
    %374 = vmatprep.subr.mxu0 0.0
    %375 = vmatpush1.msra.mxu0 %v294
    %376 = vmatprep.subr.mxu0 0.0
    %377 = vmatpush1.msra.mxu0 %v295
    %378 = vmatprep.subr.mxu0 0.0
    %379 = vmatpush1.msra.mxu0 %v296
    %380 = vmatprep.subr.mxu0 0.0
    %381 = vmatpush1.msra.mxu0 %v297
    %382 = vmatprep.subr.mxu0 0.0
    %383 = vmatpush1.msra.mxu0 %v298
    %384 = vmatprep.subr.mxu0 0.0
    %385 = vmatpush1.msra.mxu0 0.0
    %386 = vmatprep.subr.mxu0 0.0
    %387 = vmatpush1.msra.mxu0 0.0
    %388 = vmatprep.subr.mxu0 0.0
    %389 = vmatpush1.msra.mxu0 0.0
    %390 = vmatprep.subr.mxu0 0.0
    %391 = vmatpush1.msra.mxu0 0.0
    %392 = vmatprep.subr.mxu0 0.0
    %393 = vmatpush1.msra.mxu0 0.0
    %394 = vmatprep.subr.mxu0 0.0
    %395 = vmatpush1.msra.mxu0 0.0
    %396 = vmatprep.subr.mxu0 0.0
    %397 = vmatpush1.msra.mxu0 0.0
    %398 = vmatprep.subr.mxu0 0.0
    %399 = vmatpush1.msra.mxu0 0.0
    %400 = vmatprep.subr.mxu0 0.0
    %401 = vmatpush1.msra.mxu0 0.0
    %402 = vmatprep.subr.mxu0 0.0
    %403 = vmatpush1.msra.mxu0 0.0
    %404 = vmatprep.subr.mxu0 0.0
    %405 = vmatpush1.msra.mxu0 0.0
    %406 = vmatprep.subr.mxu0 0.0
    %407 = vmatpush1.msra.mxu0 0.0
    %408 = vmatprep.subr.mxu0 0.0
    %409 = vmatpush1.msra.mxu0 0.0
    %410 = vmatprep.subr.mxu0 0.0
    %411 = vmatpush1.msra.mxu0 0.0
    %412 = vmatprep.subr.mxu0 0.0
    %413 = vmatpush1.msra.mxu0 0.0
    %414 = vmatprep.subr.mxu0 0.0
    %415 = vmatpush1.msra.mxu0 0.0
    %416 = vmatprep.subr.mxu0 0.0
    %417 = vmatpush1.msra.mxu0 0.0
    %418 = vmatprep.subr.mxu0 0.0
    %419 = vmatpush1.msra.mxu0 0.0
    %420 = vmatprep.subr.mxu0 0.0
    %421 = vmatpush1.msra.mxu0 0.0
    %422 = vmatprep.subr.mxu0 0.0
    %423 = vmatpush1.msra.mxu0 0.0
    %424 = vmatprep.mubr.f32.mxu0 0.0
    %425 = vmatmul.mubr.f32.gmra.mrb[0].mxu0 %v343
    %v426 = vpop.f32.mrb[0].mxu0
    %v427 = vadd.f32 %v314, %v426
    %v428 = vpop.f32.mrb[0].mxu0
    %429 = vmatprep.mubr.f32.mxu0 0.0
    %430 = vmatmul.mubr.f32.gmra.mrb[0].mxu0 %v346
    %v431 = vpop.f32.mrb[0].mxu0
    %v432 = vadd.f32 %v319, %v431
    %v433 = vpop.f32.mrb[0].mxu0
    %434 = vmatprep.mubr.f32.mxu0 0.0
    %435 = vmatmul.mubr.f32.gmra.mrb[0].mxu0 %v349
    %v436 = vpop.f32.mrb[0].mxu0
    %v437 = vadd.f32 %v324, %v436
    %v438 = vpop.f32.mrb[0].mxu0
    %439 = vmatprep.mubr.f32.mxu0 0.0
    %440 = vmatmul.mubr.f32.gmra.mrb[0].mxu0 %v352
    %v441 = vpop.f32.mrb[0].mxu0
    %v442 = vadd.f32 %v329, %v441
    %v443 = vpop.f32.mrb[0].mxu0
    %444 = vmatprep.mubr.f32.mxu0 0.0
    %445 = vmatmul.mubr.f32.gmra.mrb[0].mxu0 %v355
    %v446 = vpop.f32.mrb[0].mxu0
    %v447 = vadd.f32 %v334, %v446
    %v448 = vpop.f32.mrb[0].mxu0
    %449 = vmatprep.mubr.f32.mxu0 0.0
    %450 = vmatmul.mubr.f32.gmra.mrb[0].mxu0 %v358
    %v451 = vpop.f32.mrb[0].mxu0
    %v452 = vadd.f32 %v339, %v451
    %v453 = vpop.f32.mrb[0].mxu0
    %454 = vdwg.mxu0
    %v455 = vmax.f32 %v427, 0.0
    %v456 = vmax.f32 %v432, 0.0
    %v457 = vmax.f32 %v437, 0.0
    %v458 = vmax.f32 %v442, 0.0
    %v459 = vmax.f32 %v447, 0.0
    %v460 = vmax.f32 %v452, 0.0
    %v461 = vld [vmem:[%s5] sm:$0xff]
    %v462 = vld [vmem:[%s5 + $0x8] sm:$0xff]
    %v463 = vld [vmem:[%s6] sm:$0xff]
    %v464 = vld [vmem:[%s6 + $0x8] sm:$0xff]
    %466 = vset.pattern.permute.xlu0 0
    %467 = vperm.xlu0 %466, %v463
    %v468 = vpop.permute.xlu0 %467
    %471 = vset.pattern.permute.xlu0 0
    %472 = vperm.xlu0 %471, %v464
    %v473 = vpop.permute.xlu0 %472
    %v476 = vsel %vm125, %v461, 0
    %v479 = vsel %vm125, %v462, 0
    %481 = vmatprep.subr.mxu0 0.0
    %482 = vmatpush1.msra.mxu0 %v455
    %483 = vmatprep.subr.mxu0 0.0
    %484 = vmatpush1.msra.mxu0 %v456
    %485 = vmatprep.subr.mxu0 0.0
    %486 = vmatpush1.msra.mxu0 %v457
    %487 = vmatprep.subr.mxu0 0.0
    %488 = vmatpush1.msra.mxu0 %v458
    %489 = vmatprep.subr.mxu0 0.0
    %490 = vmatpush1.msra.mxu0 %v459
    %491 = vmatprep.subr.mxu0 0.0
    %492 = vmatpush1.msra.mxu0 %v460
    %493 = vmatprep.subr.mxu0 0.0
    %494 = vmatpush1.msra.mxu0 0.0
    %495 = vmatprep.subr.mxu0 0.0
    %496 = vmatpush1.msra.mxu0 0.0
    %497 = vmatprep.subr.mxu0 0.0
    %498 = vmatpush1.msra.mxu0 0.0
    %499 = vmatprep.subr.mxu0 0.0
    %500 = vmatpush1.msra.mxu0 0.0
    %501 = vmatprep.subr.mxu0 0.0
    %502 = vmatpush1.msra.mxu0 0.0
    %503 = vmatprep.subr.mxu0 0.0
    %504 = vmatpush1.msra.mxu0 0.0
    %505 = vmatprep.subr.mxu0 0.0
    %506 = vmatpush1.msra.mxu0 0.0
    %507 = vmatprep.subr.mxu0 0.0
    %508 = vmatpush1.msra.mxu0 0.0
    %509 = vmatprep.subr.mxu0 0.0
    %510 = vmatpush1.msra.mxu0 0.0
    %511 = vmatprep.subr.mxu0 0.0
    %512 = vmatpush1.msra.mxu0 0.0
    %513 = vmatprep.subr.mxu0 0.0
    %514 = vmatpush1.msra.mxu0 0.0
    %515 = vmatprep.subr.mxu0 0.0
    %516 = vmatpush1.msra.mxu0 0.0
    %517 = vmatprep.subr.mxu0 0.0
    %518 = vmatpush1.msra.mxu0 0.0
    %519 = vmatprep.subr.mxu0 0.0
    %520 = vmatpush1.msra.mxu0 0.0
    %521 = vmatprep.subr.mxu0 0.0
    %522 = vmatpush1.msra.mxu0 0.0
    %523 = vmatprep.subr.mxu0 0.0
    %524 = vmatpush1.msra.mxu0 0.0
    %525 = vmatprep.subr.mxu0 0.0
    %526 = vmatpush1.msra.mxu0 0.0
    %527 = vmatprep.subr.mxu0 0.0
    %528 = vmatpush1.msra.mxu0 0.0
    %529 = vmatprep.subr.mxu0 0.0
    %530 = vmatpush1.msra.mxu0 0.0
    %531 = vmatprep.subr.mxu0 0.0
    %532 = vmatpush1.msra.mxu0 0.0
    %533 = vmatprep.subr.mxu0 0.0
    %534 = vmatpush1.msra.mxu0 0.0
    %535 = vmatprep.subr.mxu0 0.0
    %536 = vmatpush1.msra.mxu0 0.0
    %537 = vmatprep.subr.mxu0 0.0
    %538 = vmatpush1.msra.mxu0 0.0
    %539 = vmatprep.subr.mxu0 0.0
    %540 = vmatpush1.msra.mxu0 0.0
    %541 = vmatprep.subr.mxu0 0.0
    %542 = vmatpush1.msra.mxu0 0.0
    %543 = vmatprep.subr.mxu0 0.0
    %544 = vmatpush1.msra.mxu0 0.0
    %545 = vmatprep.mubr.f32.mxu0 0.0
    %546 = vmatmul.mubr.f32.gmra.mrb[0].mxu0 %v476
    %v547 = vpop.f32.mrb[0].mxu0
    %v548 = vadd.f32 %v468, %v547
    %v549 = vpop.f32.mrb[0].mxu0
    %550 = vmatprep.mubr.f32.mxu0 0.0
    %551 = vmatmul.mubr.f32.gmra.mrb[0].mxu0 %v479
    %v552 = vpop.f32.mrb[0].mxu0
    %v553 = vadd.f32 %v473, %v552
    %v554 = vpop.f32.mrb[0].mxu0
    %555 = vdwg.mxu0
    %v556 = vmax.f32 %v548, 0.0
    %v557 = vmax.f32 %v553, 0.0
    %v558 = vld [vmem:[%s7] sm:$0xff]
    %v559 = vld [vmem:[%s7 + $0x8] sm:$0xff]
    %561 = vset.pattern.permute.xlu0 0
    %562 = vperm.xlu0 %561, %v558
    %v563 = vpop.permute.xlu0 %562
    %566 = vset.pattern.permute.xlu0 0
    %567 = vperm.xlu0 %566, %v559
    %v568 = vpop.permute.xlu0 %567
    %v570 = vmul.f32 %v556, %v563
    %v571 = vmul.f32 %v557, %v568
    %vm572 = vcmask 15360
    %v573 = vsel %vm572, %v570, 0.0
    %v574 = vsel %vm572, %v571, 0.0
    %v575 = vadd.f32 %v573, %v574
    %v576 = vrot.slane %v575, 4
    %v577 = vadd.f32 %v575, %v576
    %v578 = vrot.slane %v577, 2
    %v579 = vadd.f32 %v577, %v578
    %v580 = vrot.slane %v579, 1
    %v581 = vadd.f32 %v579, %v580
    %v582 = vld [vmem:[#allocation2] sm:$0x1]
    %584 = vset.pattern.permute.xlu0 0
    %585 = vperm.xlu0 %584, %v582
    %v586 = vpop.permute.xlu0 %585
    %v588 = vlaneseq
    %v589 = vshrl.u32 %v588, 7
    %v590 = vsub.s32 0, %v589
    %v591 = vrot.slane %v586, %v590
    %v592 = vadd.f32 %v581, %v591
    %v593 = vxor.u32 %v592, 2147483648
    %v594 = vmul.f32 %v593, 1.442695
    %v595 = vpow.pop %v594
    %v596 = vadd.f32 %v595, 1.0
    %v597 = vrcp.pop %v596
    %v598 = vmul.f32 1.0, %v597
    %vm599 = vcmask 8192
    %600 = vst.msk [vmem:[#allocation3] sm:$0x1] %vm599, %v598
    // Predicated region
    $region38: #{sensitivity_forward.1} parent=1 // pred_check
      _
    $region39: #{sensitivity_forward.1} parent=1 // pred_check_branch
      %602 = sbr.rel (0) target = $region41
    $region40: #{sensitivity_forward.1} parent=1 // pred_region
      %s604 = ssub.s32 16, 16
      %605 = vsyncadd [#allocation4], %s604
      %s607 = sshll.u32 [#allocation3], 4
      %s608 = int_to_ptr.vmem [resolvable:$true] %s607
      %610 = dma.vmem_to_hbm [thread:$0]  %s608, 16, %s9, [#allocation4]
    $region41: #{sensitivity_forward.1} parent=1 // pred_fallthru
      _
    // Predicated region
    $region42: #{sensitivity_forward.1} parent=1 // pred_check
      _
    $region43: #{sensitivity_forward.1} parent=1 // pred_check_branch
      %612 = sbr.rel (0) target = $region45
    $region44: #{sensitivity_forward.1} parent=1 // pred_region
      %613 = dma.done [#allocation4], 16
    $region45: #{sensitivity_forward.1} parent=1 // pred_fallthru
      _
    %614 = vsyncpa [#allocation4], 1

</llo_original>
